<compile_context>
chip_gen: v6e
topology: v6e:2x2x1
jax: 0.10.0
libtpu: 0.0.40
codegen_flags: <defaults>
</compile_context>

<pallas_src>
import functools

import jax
import jax.numpy as jnp
from jax import lax
from jax.experimental import pallas as pl
from jax.experimental.pallas import tpu as pltpu

LANES = 128
CHUNK_ROWS = 256          # rows per inner accumulation step (256x128 f32 = 128 KiB)
NCORES = 2                # leading "parallel" axis (megacore); harmless serial loop on 1-TC chips
VMEM_LIMIT = 40 << 20     # explicit scoped-VMEM budget (< 64 MiB physical on v7x)


def _block_bytes_per_input():
    """Per-input VMEM block budget in bytes (2 inputs x 2 pipeline buffers each)."""
    try:
        kind = jax.devices()[0].device_kind.lower()
    except Exception:
        kind = ""
    if "v5 lite" in kind or "v5lite" in kind or "v5e" in kind:
        return 2 << 20        # v5e: 2 x 2 x 2 MiB = 8 MiB of input buffers
    return 4 << 20            # v6e / v7x / other: 2 x 2 x 4 MiB = 16 MiB


def _tile_rows(rows, itemsize, block_bytes):
    """Pick (tile_r, chunk): rows per grid block (multiple of chunk) and inner-loop chunk."""
    # sublane packing multiple for the native dtype: f32 -> 8, bf16 -> 16, int8 -> 32
    sub = 8 * max(1, 4 // max(1, itemsize))
    tile_r = max(CHUNK_ROWS,
                 (block_bytes // (LANES * itemsize)) // CHUNK_ROWS * CHUNK_ROWS)
    chunk = CHUNK_ROWS
    rows_up = -(-rows // sub) * sub                  # smallest legal single block
    if rows_up < tile_r:                             # small input: one just-big-enough block
        chunk = min(chunk, rows_up)
        tile_r = -(-rows_up // chunk) * chunk
    return tile_r, chunk


def _od_loss_partial_kernel(nrows_ref, p_ref, t_ref, o_ref, *,
                            tile_r, chunk, steps, masked):
    c = pl.program_id(0)
    i = pl.program_id(1)

    @pl.when(i == 0)
    def _():
        o_ref[...] = jnp.zeros_like(o_ref)

    niter = tile_r // chunk
    if masked:
        nrows = nrows_ref[0]
        block_row0 = (c * steps + i) * tile_r        # un-clamped global row of block start
        row_iota = lax.broadcasted_iota(jnp.int32, (chunk, 1), 0)

    def body(j, acc):
        off = pl.multiple_of(j * chunk, chunk)
        p = p_ref[pl.ds(off, chunk), :].astype(jnp.float32)
        t = t_ref[pl.ds(off, chunk), :].astype(jnp.float32)
        # mask2 * predict == relu(predict); fold the truth<1 select before the square.
        pred = jnp.where(t < 1.0, jnp.maximum(p, 0.0), p)
        err = pred - t
        sq = err * err
        if masked:
            # Rows at/after `nrows` belong to the ragged tail (unspecified data) -> 0.
            valid = (block_row0 + off + row_iota) < nrows      # (chunk, 1)
            sq = jnp.where(valid, sq, 0.0)
        # Fold (chunk, 128) -> (8, 128) with elementwise vreg adds (no cross-lane reduce).
        return acc + jnp.sum(sq.reshape(-1, 8, LANES), axis=0)

    acc = lax.fori_loop(0, niter, body, jnp.zeros((8, LANES), jnp.float32),
                        unroll=niter <= 8)
    o_ref[...] += acc


def od_loss(predict, truth):
    assert predict.shape == truth.shape
    total = predict.size
    itemsize = jnp.dtype(predict.dtype).itemsize

    rows = -(-total // LANES)          # number of 128-lane rows (last may be partial)
    pad = rows * LANES - total

    p_flat = predict.reshape(-1)
    t_flat = truth.reshape(-1)
    if pad:
        # TODO(synk): only non-multiple-of-128 sizes pay this tiny (<128 elem) pad; it is
        # provably loss-neutral (p=0, t=0 contributes 0) but XLA does materialize a copy.
        p_flat = jnp.pad(p_flat, (0, pad))
        t_flat = jnp.pad(t_flat, (0, pad))
    p2 = p_flat.reshape(rows, LANES)   # free reshape (bitcast) when pad == 0
    t2 = t_flat.reshape(rows, LANES)

    tile_r, chunk = _tile_rows(rows, itemsize, _block_bytes_per_input())
    num_blocks = -(-rows // tile_r)
    ncores = NCORES if num_blocks >= NCORES else 1
    steps = -(-num_blocks // ncores)
    last_block = num_blocks - 1
    # Masking only needed if the (ncores, steps) grid over-covers the real rows.
    masked = (ncores * steps * tile_r) != rows

    def in_map(c, i, _nrows):
        # Clamp: an out-of-range block (odd block count split over 2 cores) becomes a
        # duplicate of the last block whose contribution is zeroed by the in-kernel mask.
        return (jnp.minimum(c * steps + i, last_block), 0)

    kernel = functools.partial(_od_loss_partial_kernel,
                               tile_r=tile_r, chunk=chunk, steps=steps, masked=masked)

    partials = pl.pallas_call(
        kernel,
        out_shape=jax.ShapeDtypeStruct((ncores * 8, LANES), jnp.float32),
        grid_spec=pltpu.PrefetchScalarGridSpec(
            num_scalar_prefetch=1,
            grid=(ncores, steps),
            in_specs=[
                pl.BlockSpec((tile_r, LANES), in_map),
                pl.BlockSpec((tile_r, LANES), in_map),
            ],
            out_specs=pl.BlockSpec((8, LANES), lambda c, i, _nrows: (c, 0)),
        ),
        compiler_params=pltpu.CompilerParams(
            dimension_semantics=("parallel", "arbitrary"),
            vmem_limit_bytes=VMEM_LIMIT,
        ),
        cost_estimate=pl.CostEstimate(
            flops=8 * total,
            transcendentals=0,
            bytes_accessed=2 * total * itemsize + ncores * 8 * LANES * 4,
        ),
    )(jnp.array([rows], jnp.int32), p2, t2)

    return (jnp.sum(partials) / jnp.float32(total)).astype(jnp.float32)


def od_loss_ref(predict, truth):
    p = predict.astype(jnp.float32)
    t = truth.astype(jnp.float32)
    mask = t < 1.0
    relu_p = jnp.where(p > 0.0, p, 0.0)
    return jnp.mean((p - t) ** 2 * (~mask) + (relu_p - t) ** 2 * mask)


if __name__ == "__main__":
    key = jax.random.PRNGKey(0)

    def run_case(k, shape):
        kp, kt = jax.random.split(k)
        predict = jax.random.normal(kp, shape, dtype=jnp.float32)
        truth = jax.random.uniform(kt, shape, dtype=jnp.float32) * 2.0
        loss = od_loss(predict, truth)
        jax.block_until_ready(loss)
        ref = od_loss_ref(predict, truth)
        assert jnp.allclose(loss, ref, rtol=1e-4, atol=1e-6), (shape, loss, ref)

    keys = jax.random.split(key, 3)
    run_case(keys[0], (2, 4, 16, 16))   # 128-aligned, no pad, no masking
    run_case(keys[1], (2, 3, 10, 10))   # unaligned size: tiny pad + ragged-row masking
    run_case(keys[2], (2, 8, 48, 48))   # multi-chunk inner fori_loop + masked tail chunk
    print("KERNEL_OK")
</pallas_src>

<mosaic_0001>
module attributes {stable_mosaic.version = 11 : i64} {
  func.func @_od_loss_partial_kernel(%arg0: i32, %arg1: i32, %arg2: memref<1xi32, #tpu.memory_space<smem>>, %arg3: memref<16x128xf32, #tpu.memory_space<vmem>>, %arg4: memref<16x128xf32, #tpu.memory_space<vmem>>, %arg5: memref<8x128xf32, #tpu.memory_space<vmem>>) attributes {dimension_semantics = [#tpu.dimension_semantics<parallel>, #tpu.dimension_semantics<arbitrary>], iteration_bounds = array<i64: 1, 1>, scalar_prefetch = 1 : i64, scratch_operands = 0 : i64, tpu.core_type = #tpu.core_type<tc>, window_params = [{transform_indices = @transform_0, window_bounds = array<i64: 16, 128>}, {transform_indices = @transform_1, window_bounds = array<i64: 16, 128>}, {transform_indices = @transform_2, window_bounds = array<i64: 8, 128>}]} {
    %c0_i32 = arith.constant 0 : i32
    %0 = arith.cmpi eq, %arg1, %c0_i32 : i32
    %1 = arith.extui %0 : i1 to i32
    %c0_i32_0 = arith.constant 0 : i32
    %2 = arith.cmpi ne, %1, %c0_i32_0 : i32
    scf.if %2 {
      %cst_10 = arith.constant 0.000000e+00 : f32
      %23 = vector.broadcast %cst_10 : f32 to vector<8x128xf32>
      %c0_11 = arith.constant 0 : index
      %c0_12 = arith.constant 0 : index
      %24 = vector.load %arg5[%c0_11, %c0_12] : memref<8x128xf32, #tpu.memory_space<vmem>>, vector<8x128xf32>
      tpu.vector_store %arg5[%c0_11, %c0_12], %23 {strides = array<i32>} : memref<8x128xf32, #tpu.memory_space<vmem>>, vector<8x128xf32>,
    } else {
    }
    %cst = arith.constant 0.000000e+00 : f32
    %3 = vector.broadcast %cst : f32 to vector<8x128xf32>
    %c0_i32_1 = arith.constant 0 : i32
    %c16_i32 = arith.constant 16 : i32
    %4 = arith.muli %c0_i32_1, %c16_i32 : i32
    %5 = tpu.assume_multiple %4, 16 : i32
    %6 = arith.index_cast %5 : i32 to index
    %c0 = arith.constant 0 : index
    %7 = vector.load %arg3[%6, %c0] : memref<16x128xf32, #tpu.memory_space<vmem>>, vector<16x128xf32>
    %8 = arith.index_cast %5 : i32 to index
    %c0_2 = arith.constant 0 : index
    %9 = vector.load %arg4[%8, %c0_2] : memref<16x128xf32, #tpu.memory_space<vmem>>, vector<16x128xf32>
    %cst_3 = arith.constant 1.000000e+00 : f32
    %10 = vector.broadcast %cst_3 : f32 to vector<16x128xf32>
    %11 = arith.cmpf olt, %9, %10 : vector<16x128xf32>
    %cst_4 = arith.constant 0.000000e+00 : f32
    %12 = vector.broadcast %cst_4 : f32 to vector<16x128xf32>
    %13 = arith.maximumf %7, %12 : vector<16x128xf32>
    %14 = arith.select %11, %13, %7 : vector<16x128xi1>, vector<16x128xf32>
    %15 = arith.subf %14, %9 : vector<16x128xf32>
    %16 = arith.mulf %15, %15 : vector<16x128xf32>
    %17 = vector.shape_cast %16 : vector<16x128xf32> to vector<2x8x128xf32>
    %cst_5 = arith.constant dense<0.000000e+00> : vector<8x128xf32>
    %18 = vector.multi_reduction <add>, %17, %cst_5 [0] : vector<2x8x128xf32> to vector<8x128xf32>
    %19 = arith.addf %3, %18 : vector<8x128xf32>
    %c1_i32 = arith.constant 1 : i32
    %c0_6 = arith.constant 0 : index
    %c0_7 = arith.constant 0 : index
    %20 = vector.load %arg5[%c0_6, %c0_7] : memref<8x128xf32, #tpu.memory_space<vmem>>, vector<8x128xf32>
    %21 = arith.addf %20, %19 : vector<8x128xf32>
    %c0_8 = arith.constant 0 : index
    %c0_9 = arith.constant 0 : index
    %22 = vector.load %arg5[%c0_8, %c0_9] : memref<8x128xf32, #tpu.memory_space<vmem>>, vector<8x128xf32>
    tpu.vector_store %arg5[%c0_8, %c0_9], %21 {strides = array<i32>} : memref<8x128xf32, #tpu.memory_space<vmem>>, vector<8x128xf32>,
    return
  }
  func.func @transform_0(%arg0: i32, %arg1: i32, %arg2: memref<1xi32, #tpu.memory_space<smem>>) -> (i32, i32) {
    %c1_i32 = arith.constant 1 : i32
    %0 = arith.muli %arg0, %c1_i32 : i32
    %1 = arith.addi %0, %arg1 : i32
    %c0_i32 = arith.constant 0 : i32
    %2 = arith.minsi %1, %c0_i32 : i32
    %c0_i32_0 = arith.constant 0 : i32
    %c0_i32_1 = arith.constant 0 : i32
    return %2, %c0_i32_0 : i32, i32
  }
  func.func @transform_1(%arg0: i32, %arg1: i32, %arg2: memref<1xi32, #tpu.memory_space<smem>>) -> (i32, i32) {
    %c1_i32 = arith.constant 1 : i32
    %0 = arith.muli %arg0, %c1_i32 : i32
    %1 = arith.addi %0, %arg1 : i32
    %c0_i32 = arith.constant 0 : i32
    %2 = arith.minsi %1, %c0_i32 : i32
    %c0_i32_0 = arith.constant 0 : i32
    %c0_i32_1 = arith.constant 0 : i32
    return %2, %c0_i32_0 : i32, i32
  }
  func.func @transform_2(%arg0: i32, %arg1: i32, %arg2: memref<1xi32, #tpu.memory_space<smem>>) -> (i32, i32) {
    %c0_i32 = arith.constant 0 : i32
    %c0_i32_0 = arith.constant 0 : i32
    return %arg0, %c0_i32 : i32, i32
  }
}

</mosaic_0001>

<llo_original>
// kernel: tpu_custom_call.1
$region0: #{tpu_custom_call.1}
  #allocation0 [shape = 'u32[]', space=smem, size = 0x4, offset = 0x4, fixed_abs, tag = 'smem constant byte address 0x4 - core index']
  #allocation1 [shape = 'u32[144,128]{1,0:T(1,128)}', space=vmem, size = 0x12000, scoped, tag = 'internal scratch']
  #allocation2 [shape = 's32[1]{0}', space=sflag, size = 0x4, scoped, tag = 'scoped memory for tpu_custom_call.1']
  #allocation3 [shape = 's32[1]{0:T(128)S(6)}', space=smem, size = 0x200, scoped, tag = 'prefetched SMEM operand 0']
  %s0 = inlined_call_operand.<no memory space> [shape: s32[1], index: 0, kind: input, shape index: {}]
  %s1 = inlined_call_operand.hbm [shape: f32[16,128], index: 1, kind: input, shape index: {}]
  %s2 = inlined_call_operand.hbm [shape: f32[16,128], index: 2, kind: input, shape index: {}]
  %s3 = inlined_call_operand.hbm [shape: f32[8,128], index: 3, kind: output, shape index: {}]
  %s4 = sld [smem:[#allocation0]]
  $region30: #{tpu_custom_call.1} parent=0
    _
  %s6 = ssub.s32 1, %s4
  %s7 = scalar_select 0, %s6, %s4
  %8 = sst [smem:[#allocation3]] %s0
  $region1: #{tpu_custom_call.1} parent=0
    #allocation4 [shape = 'u8[8192]{0}', space=vmem, size = 0x2000, scoped, tag = 'input window, operand 1, single buffered']
    #allocation5 [shape = 's32[1]{0}', space=sflag, size = 0x4, scoped, tag = 'scoped memory for tpu_custom_call.1']
    #allocation6 [shape = 's32[1]{0}', space=sflag, size = 0x4, scoped, tag = 'scoped memory for tpu_custom_call.1']
    #allocation7 [shape = 'u8[8192]{0}', space=vmem, size = 0x2000, scoped, tag = 'input window, operand 2, single buffered']
    #allocation8 [shape = 's32[1]{0}', space=sflag, size = 0x4, scoped, tag = 'scoped memory for tpu_custom_call.1']
    #allocation9 [shape = 'u8[4096]{0}', space=vmem, size = 0x1000, scoped, tag = 'output window, operand 0, single buffered']
    %9 = vsyncpa [#allocation5], 0
    %10 = vsyncpa [#allocation8], 0
    %11 = vsyncpa [#allocation6], 0
    // Predicated region
    $region2: #{tpu_custom_call.1} parent=1 // pred_check
      _
    $region3: #{tpu_custom_call.1} parent=1 // pred_check_branch
      %13 = sbr.rel (0) target = $region5
    $region4: #{tpu_custom_call.1} parent=1 // pred_region
      %s14 = sadd.s32 0, 0
      %p15 = scmp.lt.s32.totalorder %s14, 0
      %s16 = scalar_select %p15, %s14, 0
      %s17 = smul.u32 2, %s16
      %s19 = ssub.s32 256, 256
      %20 = vsyncadd [#allocation5], %s19
      %s21 = smul.addr %s17, 128
      %s22 = scalar_lea.hbm %s1, %s21
      %s23 = sshll.u32 [#allocation4], 4
      %s24 = int_to_ptr.vmem [resolvable:$true] %s23
      %29 = dma.hbm_to_vmem [thread:$0]  %s22, 256, %s24, [#allocation5], 128, 128, 8
    $region5: #{tpu_custom_call.1} parent=1 // pred_fallthru
      _
    // Predicated region
    $region6: #{tpu_custom_call.1} parent=1 // pred_check
      _
    $region7: #{tpu_custom_call.1} parent=1 // pred_check_branch
      %31 = sbr.rel (0) target = $region9
    $region8: #{tpu_custom_call.1} parent=1 // pred_region
      %s32 = sadd.s32 0, 0
      %p33 = scmp.lt.s32.totalorder %s32, 0
      %s34 = scalar_select %p33, %s32, 0
      %s35 = smul.u32 2, %s34
      %s37 = ssub.s32 256, 256
      %38 = vsyncadd [#allocation8], %s37
      %s39 = smul.addr %s35, 128
      %s40 = scalar_lea.hbm %s2, %s39
      %s41 = sshll.u32 [#allocation7], 4
      %s42 = int_to_ptr.vmem [resolvable:$true] %s41
      %47 = dma.hbm_to_vmem [thread:$0]  %s40, 256, %s42, [#allocation8], 128, 128, 8
    $region9: #{tpu_custom_call.1} parent=1 // pred_fallthru
      _
    // Predicated region
    $region10: #{tpu_custom_call.1} parent=1 // pred_check
      _
    $region11: #{tpu_custom_call.1} parent=1 // pred_check_branch
      %49 = sbr.rel (0) target = $region13
    $region12: #{tpu_custom_call.1} parent=1 // pred_region
      %50 = dma.done [#allocation5], 256
    $region13: #{tpu_custom_call.1} parent=1 // pred_fallthru
      _
    // Predicated region
    $region14: #{tpu_custom_call.1} parent=1 // pred_check
      _
    $region15: #{tpu_custom_call.1} parent=1 // pred_check_branch
      %52 = sbr.rel (0) target = $region17
    $region16: #{tpu_custom_call.1} parent=1 // pred_region
      %53 = dma.done [#allocation8], 256
    $region17: #{tpu_custom_call.1} parent=1 // pred_fallthru
      _
    %s54 = sadd.s32 0, 0
    %p55 = scmp.lt.s32.totalorder %s54, 0
    %s56 = scalar_select %p55, %s54, 0
    %s57 = smul.u32 2, %s56
    %s58 = sadd.s32 0, 0
    %p59 = scmp.lt.s32.totalorder %s58, 0
    %s60 = scalar_select %p59, %s58, 0
    %s61 = smul.u32 2, %s60
    %p62 = scmp.eq.s32.totalorder 0, 0
    // Predicated region
    $region18: #{tpu_custom_call.1} parent=1 // pred_check
      %p63 = pneg %p62
    $region19: #{tpu_custom_call.1} parent=1 // pred_check_branch
      %65 = sbr.rel (%p63) target = $region21
    $region20: #{tpu_custom_call.1} parent=1 // pred_region
      %66 = vst [vmem:[#allocation9] sm:$0xff] 0.0
    $region21: #{tpu_custom_call.1} parent=1 // pred_fallthru
      _
    %v67 = vld [vmem:[#allocation4] sm:$0xff]
    %v68 = vld [vmem:[#allocation4 + $0x8] sm:$0xff]
    %v69 = vld [vmem:[#allocation7] sm:$0xff]
    %v70 = vld [vmem:[#allocation7 + $0x8] sm:$0xff]
    %vm71 = vcmp.lt.f32.partialorder %v69, 1.0
    %vm72 = vcmp.lt.f32.partialorder %v70, 1.0
    %v73 = vmax.f32 %v67, 0.0
    %v74 = vmax.f32 %v68, 0.0
    %v75 = vsel %vm71, %v73, %v67
    %v76 = vsel %vm72, %v74, %v68
    %v77 = vsub.f32 %v75, %v69
    %v78 = vsub.f32 %v76, %v70
    %v79 = vmul.f32 %v77, %v77
    %v80 = vmul.f32 %v78, %v78
    %v81 = vadd.f32 %v79, %v80
    %v82 = vadd.f32 %v81, 0.0
    %v83 = vld [vmem:[#allocation9] sm:$0xff]
    %v84 = vadd.f32 %v83, %v82
    %85 = vst [vmem:[#allocation9] sm:$0xff] %v84
    // Predicated region
    $region22: #{tpu_custom_call.1} parent=1 // pred_check
      _
    $region23: #{tpu_custom_call.1} parent=1 // pred_check_branch
      %87 = sbr.rel (0) target = $region25
    $region24: #{tpu_custom_call.1} parent=1 // pred_region
      %s89 = ssub.s32 128, 128
      %90 = vsyncadd [#allocation6], %s89
      %s92 = sshll.u32 [#allocation9], 4
      %s93 = int_to_ptr.vmem [resolvable:$true] %s92
      %95 = dma.vmem_to_hbm [thread:$0]  %s93, 128, %s3, [#allocation6]
    $region25: #{tpu_custom_call.1} parent=1 // pred_fallthru
      _
    // Predicated region
    $region26: #{tpu_custom_call.1} parent=1 // pred_check
      _
    $region27: #{tpu_custom_call.1} parent=1 // pred_check_branch
      %97 = sbr.rel (0) target = $region29
    $region28: #{tpu_custom_call.1} parent=1 // pred_region
      %98 = dma.done [#allocation6], 128
    $region29: #{tpu_custom_call.1} parent=1 // pred_fallthru
      _
    %99 = vsyncpa [#allocation5], 1
    %100 = vsyncpa [#allocation8], 1
    %101 = vsyncpa [#allocation6], 1

</llo_original>
